<compile_context>
chip_gen: v7x
topology: tpu7x:2x2x1
jax: 0.10.0
libtpu: 0.0.40
codegen_flags: <defaults>
</compile_context>

<pallas_src>
import functools

import jax
import jax.numpy as jnp
from jax.experimental import pallas as pl
from jax.experimental.pallas import tpu as pltpu


_OUT_SUB, _OUT_LANE = 8, 128            # aligned per-shard output block
_VMEM_LIMIT_BYTES = 32 * 1024 * 1024    # explicit scoped-VMEM limit (safe on v5e/v6e/v7x)
_FUSE_TABLE_BYTES = 2 * 1024 * 1024     # fuse the gather when padded table <= 2 MiB
_STREAM_TILE_BYTES = 5 * 1024 * 1024    # per buffer-set budget (x2 for double buffering)
_FUSED_TILE_BYTES = 6 * 1024 * 1024     # in-kernel f32 temp budget for the fused path
_MAX_TILE_ROWS = 4096


def _round_up(x, m):
    return ((x + m - 1) // m) * m


def _round_down_to(x, m):
    return max(m, (x // m) * m)


def _log_sigmoid(x):
    # numerically stable logsigmoid: min(x, 0) - log(1 + exp(-|x|))
    # TODO(synk): switch to jnp.log1p once its Mosaic lowering is confirmed.
    return jnp.minimum(x, 0.0) - jnp.log(1.0 + jnp.exp(-jnp.abs(x)))


def _num_shards():
    # The 2-way "parallel" outer axis only pays on multi-TensorCore parts
    # (v4 / v5p megacore, v7x).  On single-TC v5e/v6e it is pure overhead.
    try:
        kind = jax.devices()[0].device_kind.lower()
    except Exception:
        return 1
    return 2 if any(tag in kind for tag in ("v4", "v5p", "v7")) else 1


def _grid_dims(batch, tile_rows_target, num_shards):
    rows_per_shard = -(-batch // num_shards)
    tile_rows = min(tile_rows_target, _round_up(max(rows_per_shard, 1), 16))
    b_pad = _round_up(batch, num_shards * tile_rows)
    tiles_per_shard = b_pad // (num_shards * tile_rows)
    return tile_rows, b_pad, tiles_per_shard


# ----------------------------------------------------------------------------
# Fused-gather kernel (table resident in VMEM, gather on the MXU)
# ----------------------------------------------------------------------------
def _line_fused_kernel(vi_idx_ref, vj_idx_ref, neg_idx_ref, node_ref, otherT_ref,
                       out_ref, acc_ref, *, batch, tile_rows, tiles_per_shard,
                       num_neg, vocab_pad):
    c = pl.program_id(0)          # shard (parallel axis)
    i = pl.program_id(1)          # batch tile within shard (accumulation axis)

    @pl.when(i == 0)
    def _init():
        acc_ref[...] = jnp.zeros_like(acc_ref)

    tile_start = (c * tiles_per_shard + i) * tile_rows
    lanes = jax.lax.broadcasted_iota(jnp.int32, (tile_rows, vocab_pad), 1)

    vi_idx = vi_idx_ref[...]      # [TB, 1] int32
    vj_idx = vj_idx_ref[...]      # [TB, 1] int32
    neg_idx = neg_idx_ref[...]    # [TB, K] int32

    # Fused gather of v_i on the (otherwise idle) MXU: one_hot(v_i) @ node_table.
    vi_oh = (lanes == vi_idx).astype(jnp.float32)                       # [TB, Vp]
    vi = jnp.dot(vi_oh, node_ref[...],
                 preferred_element_type=jnp.float32)                    # [TB, D]

    # Scores of every tile row against the whole ctx/node table.
    scores = jnp.dot(vi, otherT_ref[...],
                     preferred_element_type=jnp.float32)                # [TB, Vp]

    # positive: logsigmoid(scores[b, v_j[b]])
    pos_score = jnp.sum(jnp.where(lanes == vj_idx, scores, 0.0),
                        axis=1, keepdims=True)                          # [TB, 1]
    ls = _log_sigmoid(pos_score)

    # negatives: sum_k logsigmoid(-scores[b, neg[b, k]])
    for k in range(num_neg):
        sel = lanes == neg_idx[:, k:k + 1]
        s_k = jnp.sum(jnp.where(sel, scores, 0.0), axis=1, keepdims=True)
        ls = ls + _log_sigmoid(-s_k)

    # wide accumulator: elementwise add only, no per-tile cross-lane reduce
    row_ids = jax.lax.broadcasted_iota(jnp.int32, (tile_rows, 1), 0) + tile_start
    acc_ref[...] += jnp.where(row_ids < batch, ls, 0.0)

    @pl.when(i == pl.num_programs(1) - 1)
    def _finalize():
        total = jnp.sum(acc_ref[...], keepdims=True)                    # [1, 1]
        out_ref[...] = jnp.broadcast_to(-total / batch, (_OUT_SUB, _OUT_LANE))


def _line_forward_fused(node_emb, other_emb, v_i, v_j, negsamples):
    B = int(v_i.shape[0])
    K = int(negsamples.shape[1])
    V, D = int(node_emb.shape[0]), int(node_emb.shape[1])
    V_pad = _round_up(V, 128)

    num_shards = _num_shards() if B >= 1024 else 1

    # VMEM-aware tile: scores[TB, Vp] plus a couple of [TB, D] f32 temps.
    bytes_per_row = (V_pad + 2 * D) * 4
    target = _round_down_to(min(2048, _FUSED_TILE_BYTES // bytes_per_row), 16)
    tile_rows, b_pad, tiles_per_shard = _grid_dims(B, target, num_shards)

    pad = b_pad - B
    vi_idx = jnp.pad(v_i.astype(jnp.int32), (0, pad)).reshape(b_pad, 1)
    vj_idx = jnp.pad(v_j.astype(jnp.int32), (0, pad)).reshape(b_pad, 1)
    neg_idx = jnp.pad(negsamples.astype(jnp.int32), ((0, pad), (0, 0)))

    node_p = jnp.pad(node_emb.astype(jnp.float32), ((0, V_pad - V), (0, 0)))
    otherT = jnp.pad(other_emb.astype(jnp.float32), ((0, V_pad - V), (0, 0))).T  # [D, Vp]

    kernel = functools.partial(
        _line_fused_kernel, batch=B, tile_rows=tile_rows,
        tiles_per_shard=tiles_per_shard, num_neg=K, vocab_pad=V_pad)

    out = pl.pallas_call(
        kernel,
        out_shape=jax.ShapeDtypeStruct((num_shards * _OUT_SUB, _OUT_LANE),
                                       jnp.float32),
        grid=(num_shards, tiles_per_shard),
        in_specs=[
            pl.BlockSpec((tile_rows, 1), lambda c, i: (c * tiles_per_shard + i, 0)),
            pl.BlockSpec((tile_rows, 1), lambda c, i: (c * tiles_per_shard + i, 0)),
            pl.BlockSpec((tile_rows, K), lambda c, i: (c * tiles_per_shard + i, 0)),
            pl.BlockSpec((V_pad, D), lambda c, i: (0, 0)),   # resident node table
            pl.BlockSpec((D, V_pad), lambda c, i: (0, 0)),   # resident ctx/node table^T
        ],
        out_specs=pl.BlockSpec((_OUT_SUB, _OUT_LANE), lambda c, i: (c, 0)),
        scratch_shapes=[pltpu.VMEM((tile_rows, 1), jnp.float32)],
        compiler_params=pltpu.CompilerParams(
            dimension_semantics=("parallel", "arbitrary"),
            vmem_limit_bytes=_VMEM_LIMIT_BYTES),
    )(vi_idx, vj_idx, neg_idx, node_p, otherT)

    partials = out.reshape(num_shards, _OUT_SUB, _OUT_LANE)[:, 0, 0]
    return jnp.sum(partials)


# ----------------------------------------------------------------------------
# Streaming kernel (fallback for vocabularies too large to keep in VMEM)
# ----------------------------------------------------------------------------
def _line_streaming_kernel(vi_ref, vj_ref, neg_ref, out_ref,
                           acc_pos_ref, acc_neg_ref,
                           *, batch, tile_rows, tiles_per_shard):
    c = pl.program_id(0)
    i = pl.program_id(1)

    @pl.when(i == 0)
    def _init():
        acc_pos_ref[...] = jnp.zeros_like(acc_pos_ref)
        acc_neg_ref[...] = jnp.zeros_like(acc_neg_ref)

    tile_start = (c * tiles_per_shard + i) * tile_rows

    vi = vi_ref[...]                       # bf16 [TB, D]
    vj = vj_ref[...]                       # bf16 [TB, D]

    # positive: bf16 product, f32 score, logsigmoid on a [TB, 1] column.
    pos_score = jnp.sum(vi * vj, axis=1, keepdims=True).astype(jnp.float32)
    row_ids = jax.lax.broadcasted_iota(jnp.int32, (tile_rows, 1), 0) + tile_start
    acc_pos_ref[...] += jnp.where(row_ids < batch, _log_sigmoid(pos_score), 0.0)

    # negatives: bf16 product (no f32 [K, TB, D] temp), dense [K, TB] scores.
    neg_score = jnp.sum(neg_ref[...] * vi, axis=2).astype(jnp.float32)   # [K, TB]
    col_ids = jax.lax.broadcasted_iota(jnp.int32, neg_score.shape, 1) + tile_start
    acc_neg_ref[...] += jnp.where(col_ids < batch, _log_sigmoid(-neg_score), 0.0)

    @pl.when(i == pl.num_programs(1) - 1)
    def _finalize():
        total = (jnp.sum(acc_pos_ref[...], keepdims=True)
                 + jnp.sum(acc_neg_ref[...], keepdims=True))             # [1, 1]
        out_ref[...] = jnp.broadcast_to(-total / batch, (_OUT_SUB, _OUT_LANE))


def _line_forward_streaming(node_emb, other_emb, v_i, v_j, negsamples,
                            gather_dtype=jnp.bfloat16):
    B = int(v_i.shape[0])
    K = int(negsamples.shape[1])
    D = int(node_emb.shape[1])

    num_shards = _num_shards() if B >= 1024 else 1

    # K/D-aware tile: double-buffered per-step stream ~= 2 * _STREAM_TILE_BYTES.
    bytes_per_row = (K + 2) * D * jnp.dtype(gather_dtype).itemsize
    target = _round_down_to(
        min(_MAX_TILE_ROWS, _STREAM_TILE_BYTES // bytes_per_row), 16)
    tile_rows, b_pad, tiles_per_shard = _grid_dims(B, target, num_shards)

    pad = b_pad - B
    v_i_p = jnp.pad(v_i, (0, pad))
    v_j_p = jnp.pad(v_j, (0, pad))
    neg_p = jnp.pad(negsamples, ((0, pad), (0, 0)))

    # XLA gathers (glue) cast to bf16 so the kernel streams half the HBM bytes.
    # TODO(synk): for huge tables, a paged/manual-DMA in-kernel gather would
    # avoid this HBM round trip entirely.
    vi_e = jnp.take(node_emb, v_i_p, axis=0).astype(gather_dtype)       # [Bp, D]
    vj_e = jnp.take(other_emb, v_j_p, axis=0).astype(gather_dtype)      # [Bp, D]
    neg_e = jnp.take(other_emb, neg_p.T, axis=0).astype(gather_dtype)   # [K, Bp, D]

    kernel = functools.partial(
        _line_streaming_kernel, batch=B, tile_rows=tile_rows,
        tiles_per_shard=tiles_per_shard)

    out = pl.pallas_call(
        kernel,
        out_shape=jax.ShapeDtypeStruct((num_shards * _OUT_SUB, _OUT_LANE),
                                       jnp.float32),
        grid=(num_shards, tiles_per_shard),
        in_specs=[
            pl.BlockSpec((tile_rows, D),
                         lambda c, i: (c * tiles_per_shard + i, 0)),
            pl.BlockSpec((tile_rows, D),
                         lambda c, i: (c * tiles_per_shard + i, 0)),
            pl.BlockSpec((K, tile_rows, D),
                         lambda c, i: (0, c * tiles_per_shard + i, 0)),
        ],
        out_specs=pl.BlockSpec((_OUT_SUB, _OUT_LANE), lambda c, i: (c, 0)),
        scratch_shapes=[pltpu.VMEM((tile_rows, 1), jnp.float32),
                        pltpu.VMEM((K, tile_rows), jnp.float32)],
        compiler_params=pltpu.CompilerParams(
            dimension_semantics=("parallel", "arbitrary"),
            vmem_limit_bytes=_VMEM_LIMIT_BYTES),
    )(vi_e, vj_e, neg_e)

    partials = out.reshape(num_shards, _OUT_SUB, _OUT_LANE)[:, 0, 0]
    return jnp.sum(partials)


# ----------------------------------------------------------------------------
# Public wrapper + reference + init
# ----------------------------------------------------------------------------
def line_forward(node_emb, ctx_emb, v_i, v_j, negsamples, order):
    """Pallas implementation of Line.forward. Returns a scalar f32 loss."""
    assert order in (1, 2)
    other = ctx_emb if order == 2 else node_emb
    V, D = int(node_emb.shape[0]), int(node_emb.shape[1])
    if _round_up(V, 128) * D * 4 <= _FUSE_TABLE_BYTES:
        return _line_forward_fused(node_emb, other, v_i, v_j, negsamples)
    return _line_forward_streaming(node_emb, other, v_i, v_j, negsamples)


def line_reference(node_emb, ctx_emb, v_i, v_j, negsamples, order):
    """Pure-JAX f32 reference matching the PyTorch module."""
    table = ctx_emb if order == 2 else node_emb
    vi = node_emb[v_i]
    vj = table[v_j]
    negativenodes = -table[negsamples]
    pos = jax.nn.log_sigmoid(jnp.sum(vi * vj, axis=1))
    negb = jnp.sum(jax.nn.log_sigmoid(
        jnp.sum(vi[:, None, :] * negativenodes, axis=2)), axis=1)
    return -jnp.mean(pos + negb)


def init_line_params(key, size, embed_dim, order):
    """Deterministic re-implementation of Line.__init__ weight init."""
    k_nodes, k_ctx = jax.random.split(key)
    nodes = (jax.random.uniform(k_nodes, (size, embed_dim), jnp.float32,
                                minval=-0.5, maxval=0.5) / embed_dim)
    ctx = None
    if order == 2:
        ctx = (jax.random.uniform(k_ctx, (size, embed_dim), jnp.float32,
                                  minval=-0.5, maxval=0.5) / embed_dim)
    return nodes, ctx


if __name__ == "__main__":
    size = 64          # vocabulary (number of nodes)
    embed_dim = 128    # default embed_dim of the module
    B = 8              # batch of edges
    K = 8              # negative samples per edge

    key = jax.random.PRNGKey(0)
    k_params, k_vi, k_vj, k_neg = jax.random.split(key, 4)

    node_emb, ctx_emb = init_line_params(k_params, size, embed_dim, order=2)

    v_i = jax.random.randint(k_vi, (B,), 0, size, dtype=jnp.int32)
    v_j = jax.random.randint(k_vj, (B,), 0, size, dtype=jnp.int32)
    negsamples = jax.random.randint(k_neg, (B, K), 0, size, dtype=jnp.int32)

    ok = True
    for order in (2, 1):   # exercise both orders
        ref = jax.block_until_ready(
            line_reference(node_emb, ctx_emb, v_i, v_j, negsamples, order))

        # fused-gather path (small vocab -> tables resident in VMEM)
        fused = jax.block_until_ready(
            line_forward(node_emb, ctx_emb, v_i, v_j, negsamples, order))

        # streaming fallback path (forced, as used for huge vocabularies)
        other = ctx_emb if order == 2 else node_emb
        stream = jax.block_until_ready(
            _line_forward_streaming(node_emb, other, v_i, v_j, negsamples))

        for name, val in (("fused", fused), ("streaming", stream)):
            if not jnp.allclose(val, ref, rtol=1e-2, atol=1e-2):
                ok = False
                print(f"MISMATCH order={order} path={name}: {val} vs ref {ref}")

    if ok:
        print("KERNEL_OK")
</pallas_src>

<mosaic_0001>
module attributes {stable_mosaic.version = 11 : i64} {
  func.func @_line_fused_kernel(%arg0: i32, %arg1: i32, %arg2: memref<16x1xi32, #tpu.memory_space<vmem>>, %arg3: memref<16x1xi32, #tpu.memory_space<vmem>>, %arg4: memref<16x8xi32, #tpu.memory_space<vmem>>, %arg5: memref<128x128xf32, #tpu.memory_space<vmem>>, %arg6: memref<128x128xf32, #tpu.memory_space<vmem>>, %arg7: memref<8x128xf32, #tpu.memory_space<vmem>>, %arg8: memref<16x1xf32, #tpu.memory_space<vmem>>) attributes {dimension_semantics = [#tpu.dimension_semantics<parallel>, #tpu.dimension_semantics<arbitrary>], iteration_bounds = array<i64: 1, 1>, scalar_prefetch = 0 : i64, scratch_operands = 1 : i64, tpu.core_type = #tpu.core_type<tc>, window_params = [{transform_indices = @transform_0, window_bounds = array<i64: 16, 1>}, {transform_indices = @transform_1, window_bounds = array<i64: 16, 1>}, {transform_indices = @transform_2, window_bounds = array<i64: 16, 8>}, {pipeline_mode = #tpu.pipeline_mode<synchronous>, transform_indices = @transform_3, window_bounds = array<i64: 128, 128>}, {pipeline_mode = #tpu.pipeline_mode<synchronous>, transform_indices = @transform_4, window_bounds = array<i64: 128, 128>}, {transform_indices = @transform_5, window_bounds = array<i64: 8, 128>}]} {
    %c0_i32 = arith.constant 0 : i32
    %0 = arith.cmpi eq, %arg1, %c0_i32 : i32
    %1 = arith.extui %0 : i1 to i32
    %c0_i32_0 = arith.constant 0 : i32
    %2 = arith.cmpi ne, %1, %c0_i32_0 : i32
    scf.if %2 {
      %cst_71 = arith.constant 0.000000e+00 : f32
      %207 = vector.broadcast %cst_71 : f32 to vector<16x1xf32>
      %c0_72 = arith.constant 0 : index
      %c0_73 = arith.constant 0 : index
      %208 = vector.load %arg8[%c0_72, %c0_73] : memref<16x1xf32, #tpu.memory_space<vmem>>, vector<16x1xf32>
      tpu.vector_store %arg8[%c0_72, %c0_73], %207 {strides = array<i32>} : memref<16x1xf32, #tpu.memory_space<vmem>>, vector<16x1xf32>,
    } else {
    }
    %c1_i32 = arith.constant 1 : i32
    %3 = arith.muli %arg0, %c1_i32 : i32
    %4 = arith.addi %3, %arg1 : i32
    %c16_i32 = arith.constant 16 : i32
    %5 = arith.muli %4, %c16_i32 : i32
    %6 = tpu.iota {dimensions = array<i32: 1>} : vector<16x128xi32>
    %c0 = arith.constant 0 : index
    %c0_1 = arith.constant 0 : index
    %7 = vector.load %arg2[%c0, %c0_1] : memref<16x1xi32, #tpu.memory_space<vmem>>, vector<16x1xi32>
    %c0_2 = arith.constant 0 : index
    %c0_3 = arith.constant 0 : index
    %8 = vector.load %arg3[%c0_2, %c0_3] : memref<16x1xi32, #tpu.memory_space<vmem>>, vector<16x1xi32>
    %c0_4 = arith.constant 0 : index
    %c0_5 = arith.constant 0 : index
    %9 = vector.load %arg4[%c0_4, %c0_5] : memref<16x8xi32, #tpu.memory_space<vmem>>, vector<16x8xi32>
    %10 = vector.broadcast %7 : vector<16x1xi32> to vector<16x128xi32>
    %11 = arith.cmpi eq, %6, %10 : vector<16x128xi32>
    %12 = arith.extui %11 : vector<16x128xi1> to vector<16x128xi32>
    %13 = arith.sitofp %12 : vector<16x128xi32> to vector<16x128xf32>
    %c0_6 = arith.constant 0 : index
    %c0_7 = arith.constant 0 : index
    %14 = vector.load %arg5[%c0_6, %c0_7] : memref<128x128xf32, #tpu.memory_space<vmem>>, vector<128x128xf32>
    %cst = arith.constant dense<0.000000e+00> : vector<16x128xf32>
    %15 = tpu.matmul %13, %14, %cst {dimension_numbers = #tpu.dot_dimension_numbers<[1], [0], [0], [1], [0, 0, 1, 1], [], []>} : vector<16x128xf32>, vector<128x128xf32>, vector<16x128xf32> -> vector<16x128xf32>
    %c0_8 = arith.constant 0 : index
    %c0_9 = arith.constant 0 : index
    %16 = vector.load %arg6[%c0_8, %c0_9] : memref<128x128xf32, #tpu.memory_space<vmem>>, vector<128x128xf32>
    %cst_10 = arith.constant dense<0.000000e+00> : vector<16x128xf32>
    %17 = tpu.matmul %15, %16, %cst_10 {dimension_numbers = #tpu.dot_dimension_numbers<[1], [0], [0], [1], [0, 0, 1, 1], [], []>} : vector<16x128xf32>, vector<128x128xf32>, vector<16x128xf32> -> vector<16x128xf32>
    %18 = vector.broadcast %8 : vector<16x1xi32> to vector<16x128xi32>
    %19 = arith.cmpi eq, %6, %18 : vector<16x128xi32>
    %cst_11 = arith.constant 0.000000e+00 : f32
    %20 = vector.broadcast %cst_11 : f32 to vector<16x128xf32>
    %21 = arith.select %19, %17, %20 : vector<16x128xi1>, vector<16x128xf32>
    %cst_12 = arith.constant dense<0.000000e+00> : vector<16xf32>
    %22 = vector.multi_reduction <add>, %21, %cst_12 [1] : vector<16x128xf32> to vector<16xf32>
    %23 = vector.shape_cast %22 : vector<16xf32> to vector<16x1xf32>
    %cst_13 = arith.constant 0.000000e+00 : f32
    %24 = vector.broadcast %cst_13 : f32 to vector<16x1xf32>
    %25 = arith.minimumf %23, %24 : vector<16x1xf32>
    %26 = math.absf %23 : vector<16x1xf32>
    %cst_14 = arith.constant 0.000000e+00 : f32
    %27 = vector.broadcast %cst_14 : f32 to vector<16x1xf32>
    %28 = arith.subf %27, %26 : vector<16x1xf32>
    %29 = math.exp %28 : vector<16x1xf32>
    %cst_15 = arith.constant 1.000000e+00 : f32
    %30 = vector.broadcast %cst_15 : f32 to vector<16x1xf32>
    %31 = arith.addf %30, %29 : vector<16x1xf32>
    %32 = math.log %31 : vector<16x1xf32>
    %33 = arith.subf %25, %32 : vector<16x1xf32>
    %34 = vector.extract_strided_slice %9 {offsets = [0, 0], sizes = [16, 1], strides = [1, 1]} : vector<16x8xi32> to vector<16x1xi32>
    %35 = vector.broadcast %34 : vector<16x1xi32> to vector<16x128xi32>
    %36 = arith.cmpi eq, %6, %35 : vector<16x128xi32>
    %cst_16 = arith.constant 0.000000e+00 : f32
    %37 = vector.broadcast %cst_16 : f32 to vector<16x128xf32>
    %38 = arith.select %36, %17, %37 : vector<16x128xi1>, vector<16x128xf32>
    %cst_17 = arith.constant dense<0.000000e+00> : vector<16xf32>
    %39 = vector.multi_reduction <add>, %38, %cst_17 [1] : vector<16x128xf32> to vector<16xf32>
    %40 = vector.shape_cast %39 : vector<16xf32> to vector<16x1xf32>
    %cst_18 = arith.constant 0.000000e+00 : f32
    %41 = vector.broadcast %cst_18 : f32 to vector<16x1xf32>
    %42 = arith.subf %41, %40 : vector<16x1xf32>
    %cst_19 = arith.constant 0.000000e+00 : f32
    %43 = vector.broadcast %cst_19 : f32 to vector<16x1xf32>
    %44 = arith.minimumf %42, %43 : vector<16x1xf32>
    %45 = math.absf %42 : vector<16x1xf32>
    %cst_20 = arith.constant 0.000000e+00 : f32
    %46 = vector.broadcast %cst_20 : f32 to vector<16x1xf32>
    %47 = arith.subf %46, %45 : vector<16x1xf32>
    %48 = math.exp %47 : vector<16x1xf32>
    %cst_21 = arith.constant 1.000000e+00 : f32
    %49 = vector.broadcast %cst_21 : f32 to vector<16x1xf32>
    %50 = arith.addf %49, %48 : vector<16x1xf32>
    %51 = math.log %50 : vector<16x1xf32>
    %52 = arith.subf %44, %51 : vector<16x1xf32>
    %53 = arith.addf %33, %52 : vector<16x1xf32>
    %54 = vector.extract_strided_slice %9 {offsets = [0, 1], sizes = [16, 1], strides = [1, 1]} : vector<16x8xi32> to vector<16x1xi32>
    %55 = vector.broadcast %54 : vector<16x1xi32> to vector<16x128xi32>
    %56 = arith.cmpi eq, %6, %55 : vector<16x128xi32>
    %cst_22 = arith.constant 0.000000e+00 : f32
    %57 = vector.broadcast %cst_22 : f32 to vector<16x128xf32>
    %58 = arith.select %56, %17, %57 : vector<16x128xi1>, vector<16x128xf32>
    %cst_23 = arith.constant dense<0.000000e+00> : vector<16xf32>
    %59 = vector.multi_reduction <add>, %58, %cst_23 [1] : vector<16x128xf32> to vector<16xf32>
    %60 = vector.shape_cast %59 : vector<16xf32> to vector<16x1xf32>
    %cst_24 = arith.constant 0.000000e+00 : f32
    %61 = vector.broadcast %cst_24 : f32 to vector<16x1xf32>
    %62 = arith.subf %61, %60 : vector<16x1xf32>
    %cst_25 = arith.constant 0.000000e+00 : f32
    %63 = vector.broadcast %cst_25 : f32 to vector<16x1xf32>
    %64 = arith.minimumf %62, %63 : vector<16x1xf32>
    %65 = math.absf %62 : vector<16x1xf32>
    %cst_26 = arith.constant 0.000000e+00 : f32
    %66 = vector.broadcast %cst_26 : f32 to vector<16x1xf32>
    %67 = arith.subf %66, %65 : vector<16x1xf32>
    %68 = math.exp %67 : vector<16x1xf32>
    %cst_27 = arith.constant 1.000000e+00 : f32
    %69 = vector.broadcast %cst_27 : f32 to vector<16x1xf32>
    %70 = arith.addf %69, %68 : vector<16x1xf32>
    %71 = math.log %70 : vector<16x1xf32>
    %72 = arith.subf %64, %71 : vector<16x1xf32>
    %73 = arith.addf %53, %72 : vector<16x1xf32>
    %74 = vector.extract_strided_slice %9 {offsets = [0, 2], sizes = [16, 1], strides = [1, 1]} : vector<16x8xi32> to vector<16x1xi32>
    %75 = vector.broadcast %74 : vector<16x1xi32> to vector<16x128xi32>
    %76 = arith.cmpi eq, %6, %75 : vector<16x128xi32>
    %cst_28 = arith.constant 0.000000e+00 : f32
    %77 = vector.broadcast %cst_28 : f32 to vector<16x128xf32>
    %78 = arith.select %76, %17, %77 : vector<16x128xi1>, vector<16x128xf32>
    %cst_29 = arith.constant dense<0.000000e+00> : vector<16xf32>
    %79 = vector.multi_reduction <add>, %78, %cst_29 [1] : vector<16x128xf32> to vector<16xf32>
    %80 = vector.shape_cast %79 : vector<16xf32> to vector<16x1xf32>
    %cst_30 = arith.constant 0.000000e+00 : f32
    %81 = vector.broadcast %cst_30 : f32 to vector<16x1xf32>
    %82 = arith.subf %81, %80 : vector<16x1xf32>
    %cst_31 = arith.constant 0.000000e+00 : f32
    %83 = vector.broadcast %cst_31 : f32 to vector<16x1xf32>
    %84 = arith.minimumf %82, %83 : vector<16x1xf32>
    %85 = math.absf %82 : vector<16x1xf32>
    %cst_32 = arith.constant 0.000000e+00 : f32
    %86 = vector.broadcast %cst_32 : f32 to vector<16x1xf32>
    %87 = arith.subf %86, %85 : vector<16x1xf32>
    %88 = math.exp %87 : vector<16x1xf32>
    %cst_33 = arith.constant 1.000000e+00 : f32
    %89 = vector.broadcast %cst_33 : f32 to vector<16x1xf32>
    %90 = arith.addf %89, %88 : vector<16x1xf32>
    %91 = math.log %90 : vector<16x1xf32>
    %92 = arith.subf %84, %91 : vector<16x1xf32>
    %93 = arith.addf %73, %92 : vector<16x1xf32>
    %94 = vector.extract_strided_slice %9 {offsets = [0, 3], sizes = [16, 1], strides = [1, 1]} : vector<16x8xi32> to vector<16x1xi32>
    %95 = vector.broadcast %94 : vector<16x1xi32> to vector<16x128xi32>
    %96 = arith.cmpi eq, %6, %95 : vector<16x128xi32>
    %cst_34 = arith.constant 0.000000e+00 : f32
    %97 = vector.broadcast %cst_34 : f32 to vector<16x128xf32>
    %98 = arith.select %96, %17, %97 : vector<16x128xi1>, vector<16x128xf32>
    %cst_35 = arith.constant dense<0.000000e+00> : vector<16xf32>
    %99 = vector.multi_reduction <add>, %98, %cst_35 [1] : vector<16x128xf32> to vector<16xf32>
    %100 = vector.shape_cast %99 : vector<16xf32> to vector<16x1xf32>
    %cst_36 = arith.constant 0.000000e+00 : f32
    %101 = vector.broadcast %cst_36 : f32 to vector<16x1xf32>
    %102 = arith.subf %101, %100 : vector<16x1xf32>
    %cst_37 = arith.constant 0.000000e+00 : f32
    %103 = vector.broadcast %cst_37 : f32 to vector<16x1xf32>
    %104 = arith.minimumf %102, %103 : vector<16x1xf32>
    %105 = math.absf %102 : vector<16x1xf32>
    %cst_38 = arith.constant 0.000000e+00 : f32
    %106 = vector.broadcast %cst_38 : f32 to vector<16x1xf32>
    %107 = arith.subf %106, %105 : vector<16x1xf32>
    %108 = math.exp %107 : vector<16x1xf32>
    %cst_39 = arith.constant 1.000000e+00 : f32
    %109 = vector.broadcast %cst_39 : f32 to vector<16x1xf32>
    %110 = arith.addf %109, %108 : vector<16x1xf32>
    %111 = math.log %110 : vector<16x1xf32>
    %112 = arith.subf %104, %111 : vector<16x1xf32>
    %113 = arith.addf %93, %112 : vector<16x1xf32>
    %114 = vector.extract_strided_slice %9 {offsets = [0, 4], sizes = [16, 1], strides = [1, 1]} : vector<16x8xi32> to vector<16x1xi32>
    %115 = vector.broadcast %114 : vector<16x1xi32> to vector<16x128xi32>
    %116 = arith.cmpi eq, %6, %115 : vector<16x128xi32>
    %cst_40 = arith.constant 0.000000e+00 : f32
    %117 = vector.broadcast %cst_40 : f32 to vector<16x128xf32>
    %118 = arith.select %116, %17, %117 : vector<16x128xi1>, vector<16x128xf32>
    %cst_41 = arith.constant dense<0.000000e+00> : vector<16xf32>
    %119 = vector.multi_reduction <add>, %118, %cst_41 [1] : vector<16x128xf32> to vector<16xf32>
    %120 = vector.shape_cast %119 : vector<16xf32> to vector<16x1xf32>
    %cst_42 = arith.constant 0.000000e+00 : f32
    %121 = vector.broadcast %cst_42 : f32 to vector<16x1xf32>
    %122 = arith.subf %121, %120 : vector<16x1xf32>
    %cst_43 = arith.constant 0.000000e+00 : f32
    %123 = vector.broadcast %cst_43 : f32 to vector<16x1xf32>
    %124 = arith.minimumf %122, %123 : vector<16x1xf32>
    %125 = math.absf %122 : vector<16x1xf32>
    %cst_44 = arith.constant 0.000000e+00 : f32
    %126 = vector.broadcast %cst_44 : f32 to vector<16x1xf32>
    %127 = arith.subf %126, %125 : vector<16x1xf32>
    %128 = math.exp %127 : vector<16x1xf32>
    %cst_45 = arith.constant 1.000000e+00 : f32
    %129 = vector.broadcast %cst_45 : f32 to vector<16x1xf32>
    %130 = arith.addf %129, %128 : vector<16x1xf32>
    %131 = math.log %130 : vector<16x1xf32>
    %132 = arith.subf %124, %131 : vector<16x1xf32>
    %133 = arith.addf %113, %132 : vector<16x1xf32>
    %134 = vector.extract_strided_slice %9 {offsets = [0, 5], sizes = [16, 1], strides = [1, 1]} : vector<16x8xi32> to vector<16x1xi32>
    %135 = vector.broadcast %134 : vector<16x1xi32> to vector<16x128xi32>
    %136 = arith.cmpi eq, %6, %135 : vector<16x128xi32>
    %cst_46 = arith.constant 0.000000e+00 : f32
    %137 = vector.broadcast %cst_46 : f32 to vector<16x128xf32>
    %138 = arith.select %136, %17, %137 : vector<16x128xi1>, vector<16x128xf32>
    %cst_47 = arith.constant dense<0.000000e+00> : vector<16xf32>
    %139 = vector.multi_reduction <add>, %138, %cst_47 [1] : vector<16x128xf32> to vector<16xf32>
    %140 = vector.shape_cast %139 : vector<16xf32> to vector<16x1xf32>
    %cst_48 = arith.constant 0.000000e+00 : f32
    %141 = vector.broadcast %cst_48 : f32 to vector<16x1xf32>
    %142 = arith.subf %141, %140 : vector<16x1xf32>
    %cst_49 = arith.constant 0.000000e+00 : f32
    %143 = vector.broadcast %cst_49 : f32 to vector<16x1xf32>
    %144 = arith.minimumf %142, %143 : vector<16x1xf32>
    %145 = math.absf %142 : vector<16x1xf32>
    %cst_50 = arith.constant 0.000000e+00 : f32
    %146 = vector.broadcast %cst_50 : f32 to vector<16x1xf32>
    %147 = arith.subf %146, %145 : vector<16x1xf32>
    %148 = math.exp %147 : vector<16x1xf32>
    %cst_51 = arith.constant 1.000000e+00 : f32
    %149 = vector.broadcast %cst_51 : f32 to vector<16x1xf32>
    %150 = arith.addf %149, %148 : vector<16x1xf32>
    %151 = math.log %150 : vector<16x1xf32>
    %152 = arith.subf %144, %151 : vector<16x1xf32>
    %153 = arith.addf %133, %152 : vector<16x1xf32>
    %154 = vector.extract_strided_slice %9 {offsets = [0, 6], sizes = [16, 1], strides = [1, 1]} : vector<16x8xi32> to vector<16x1xi32>
    %155 = vector.broadcast %154 : vector<16x1xi32> to vector<16x128xi32>
    %156 = arith.cmpi eq, %6, %155 : vector<16x128xi32>
    %cst_52 = arith.constant 0.000000e+00 : f32
    %157 = vector.broadcast %cst_52 : f32 to vector<16x128xf32>
    %158 = arith.select %156, %17, %157 : vector<16x128xi1>, vector<16x128xf32>
    %cst_53 = arith.constant dense<0.000000e+00> : vector<16xf32>
    %159 = vector.multi_reduction <add>, %158, %cst_53 [1] : vector<16x128xf32> to vector<16xf32>
    %160 = vector.shape_cast %159 : vector<16xf32> to vector<16x1xf32>
    %cst_54 = arith.constant 0.000000e+00 : f32
    %161 = vector.broadcast %cst_54 : f32 to vector<16x1xf32>
    %162 = arith.subf %161, %160 : vector<16x1xf32>
    %cst_55 = arith.constant 0.000000e+00 : f32
    %163 = vector.broadcast %cst_55 : f32 to vector<16x1xf32>
    %164 = arith.minimumf %162, %163 : vector<16x1xf32>
    %165 = math.absf %162 : vector<16x1xf32>
    %cst_56 = arith.constant 0.000000e+00 : f32
    %166 = vector.broadcast %cst_56 : f32 to vector<16x1xf32>
    %167 = arith.subf %166, %165 : vector<16x1xf32>
    %168 = math.exp %167 : vector<16x1xf32>
    %cst_57 = arith.constant 1.000000e+00 : f32
    %169 = vector.broadcast %cst_57 : f32 to vector<16x1xf32>
    %170 = arith.addf %169, %168 : vector<16x1xf32>
    %171 = math.log %170 : vector<16x1xf32>
    %172 = arith.subf %164, %171 : vector<16x1xf32>
    %173 = arith.addf %153, %172 : vector<16x1xf32>
    %174 = vector.extract_strided_slice %9 {offsets = [0, 7], sizes = [16, 1], strides = [1, 1]} : vector<16x8xi32> to vector<16x1xi32>
    %175 = vector.broadcast %174 : vector<16x1xi32> to vector<16x128xi32>
    %176 = arith.cmpi eq, %6, %175 : vector<16x128xi32>
    %cst_58 = arith.constant 0.000000e+00 : f32
    %177 = vector.broadcast %cst_58 : f32 to vector<16x128xf32>
    %178 = arith.select %176, %17, %177 : vector<16x128xi1>, vector<16x128xf32>
    %cst_59 = arith.constant dense<0.000000e+00> : vector<16xf32>
    %179 = vector.multi_reduction <add>, %178, %cst_59 [1] : vector<16x128xf32> to vector<16xf32>
    %180 = vector.shape_cast %179 : vector<16xf32> to vector<16x1xf32>
    %cst_60 = arith.constant 0.000000e+00 : f32
    %181 = vector.broadcast %cst_60 : f32 to vector<16x1xf32>
    %182 = arith.subf %181, %180 : vector<16x1xf32>
    %cst_61 = arith.constant 0.000000e+00 : f32
    %183 = vector.broadcast %cst_61 : f32 to vector<16x1xf32>
    %184 = arith.minimumf %182, %183 : vector<16x1xf32>
    %185 = math.absf %182 : vector<16x1xf32>
    %cst_62 = arith.constant 0.000000e+00 : f32
    %186 = vector.broadcast %cst_62 : f32 to vector<16x1xf32>
    %187 = arith.subf %186, %185 : vector<16x1xf32>
    %188 = math.exp %187 : vector<16x1xf32>
    %cst_63 = arith.constant 1.000000e+00 : f32
    %189 = vector.broadcast %cst_63 : f32 to vector<16x1xf32>
    %190 = arith.addf %189, %188 : vector<16x1xf32>
    %191 = math.log %190 : vector<16x1xf32>
    %192 = arith.subf %184, %191 : vector<16x1xf32>
    %193 = arith.addf %173, %192 : vector<16x1xf32>
    %194 = tpu.iota {dimensions = array<i32: 0>} : vector<16x1xi32>
    %195 = vector.broadcast %5 : i32 to vector<16x1xi32>
    %196 = arith.addi %194, %195 : vector<16x1xi32>
    %c0_64 = arith.constant 0 : index
    %c0_65 = arith.constant 0 : index
    %197 = vector.load %arg8[%c0_64, %c0_65] : memref<16x1xf32, #tpu.memory_space<vmem>>, vector<16x1xf32>
    %c8_i32 = arith.constant 8 : i32
    %198 = vector.broadcast %c8_i32 : i32 to vector<16x1xi32>
    %199 = arith.cmpi slt, %196, %198 : vector<16x1xi32>
    %cst_66 = arith.constant 0.000000e+00 : f32
    %200 = vector.broadcast %cst_66 : f32 to vector<16x1xf32>
    %201 = arith.select %199, %193, %200 : vector<16x1xi1>, vector<16x1xf32>
    %202 = arith.addf %197, %201 : vector<16x1xf32>
    %c0_67 = arith.constant 0 : index
    %c0_68 = arith.constant 0 : index
    %203 = vector.load %arg8[%c0_67, %c0_68] : memref<16x1xf32, #tpu.memory_space<vmem>>, vector<16x1xf32>
    tpu.vector_store %arg8[%c0_67, %c0_68], %202 {strides = array<i32>} : memref<16x1xf32, #tpu.memory_space<vmem>>, vector<16x1xf32>,
    %c0_i32_69 = arith.constant 0 : i32
    %204 = arith.cmpi eq, %arg1, %c0_i32_69 : i32
    %205 = arith.extui %204 : i1 to i32
    %c0_i32_70 = arith.constant 0 : i32
    %206 = arith.cmpi ne, %205, %c0_i32_70 : i32
    scf.if %206 {
      %c0_71 = arith.constant 0 : index
      %c0_72 = arith.constant 0 : index
      %207 = vector.load %arg8[%c0_71, %c0_72] : memref<16x1xf32, #tpu.memory_space<vmem>>, vector<16x1xf32>
      %208 = vector.shape_cast %207 : vector<16x1xf32> to vector<1x16x1xf32>
      %cst_73 = arith.constant dense<0.000000e+00> : vector<1xf32>
      %209 = vector.multi_reduction <add>, %208, %cst_73 [1, 2] : vector<1x16x1xf32> to vector<1xf32>
      %210 = vector.shape_cast %209 : vector<1xf32> to vector<1x1x1xf32>
      %211 = vector.extract %210[0, 0, 0] : f32 from vector<1x1x1xf32>
      %212 = vector.broadcast %211 : f32 to vector<1x1xf32>
      %cst_74 = arith.constant 0.000000e+00 : f32
      %213 = vector.broadcast %cst_74 : f32 to vector<1x1xf32>
      %214 = arith.subf %213, %212 : vector<1x1xf32>
      %cst_75 = arith.constant 8.000000e+00 : f32
      %215 = vector.broadcast %cst_75 : f32 to vector<1x1xf32>
      %216 = arith.divf %214, %215 : vector<1x1xf32>
      %217 = vector.shape_cast %216 : vector<1x1xf32> to vector<1x1xf32>
      %218 = vector.broadcast %217 : vector<1x1xf32> to vector<8x128xf32>
      %c0_76 = arith.constant 0 : index
      %c0_77 = arith.constant 0 : index
      %219 = vector.load %arg7[%c0_76, %c0_77] : memref<8x128xf32, #tpu.memory_space<vmem>>, vector<8x128xf32>
      tpu.vector_store %arg7[%c0_76, %c0_77], %218 {strides = array<i32>} : memref<8x128xf32, #tpu.memory_space<vmem>>, vector<8x128xf32>,
    } else {
    }
    return
  }
  func.func @transform_0(%arg0: i32, %arg1: i32) -> (i32, i32) {
    %c1_i32 = arith.constant 1 : i32
    %0 = arith.muli %arg0, %c1_i32 : i32
    %1 = arith.addi %0, %arg1 : i32
    %c0_i32 = arith.constant 0 : i32
    %c0_i32_0 = arith.constant 0 : i32
    return %1, %c0_i32 : i32, i32
  }
  func.func @transform_1(%arg0: i32, %arg1: i32) -> (i32, i32) {
    %c1_i32 = arith.constant 1 : i32
    %0 = arith.muli %arg0, %c1_i32 : i32
    %1 = arith.addi %0, %arg1 : i32
    %c0_i32 = arith.constant 0 : i32
    %c0_i32_0 = arith.constant 0 : i32
    return %1, %c0_i32 : i32, i32
  }
  func.func @transform_2(%arg0: i32, %arg1: i32) -> (i32, i32) {
    %c1_i32 = arith.constant 1 : i32
    %0 = arith.muli %arg0, %c1_i32 : i32
    %1 = arith.addi %0, %arg1 : i32
    %c0_i32 = arith.constant 0 : i32
    %c0_i32_0 = arith.constant 0 : i32
    return %1, %c0_i32 : i32, i32
  }
  func.func @transform_3(%arg0: i32, %arg1: i32) -> (i32, i32) {
    %c0_i32 = arith.constant 0 : i32
    %c0_i32_0 = arith.constant 0 : i32
    %c0_i32_1 = arith.constant 0 : i32
    return %c0_i32, %c0_i32_0 : i32, i32
  }
  func.func @transform_4(%arg0: i32, %arg1: i32) -> (i32, i32) {
    %c0_i32 = arith.constant 0 : i32
    %c0_i32_0 = arith.constant 0 : i32
    %c0_i32_1 = arith.constant 0 : i32
    return %c0_i32, %c0_i32_0 : i32, i32
  }
  func.func @transform_5(%arg0: i32, %arg1: i32) -> (i32, i32) {
    %c0_i32 = arith.constant 0 : i32
    %c0_i32_0 = arith.constant 0 : i32
    return %arg0, %c0_i32 : i32, i32
  }
}

</mosaic_0001>

<llo_original>
// kernel: tpu_custom_call.1
$region0: #{tpu_custom_call.1}
  #allocation0 [shape = 'u32[]', space=smem, size = 0x4, offset = 0x4, fixed_abs, tag = 'smem constant byte address 0x4 - core index']
  #allocation1 [shape = 'u32[144,128]{1,0:T(1,128)}', space=vmem, size = 0x12000, scoped, tag = 'internal scratch']
  #allocation2 [shape = 'f32[16,1]{1,0:T(8,128)}', space=vmem, size = 0x2000, scoped, tag = 'scratch operand']
  %s0 = inlined_call_operand.vmem [shape: s32[16,1], index: 0, kind: input, shape index: {}]
  %s1 = inlined_call_operand.vmem [shape: s32[16,1], index: 1, kind: input, shape index: {}]
  %s2 = inlined_call_operand.vmem [shape: s32[16,8], index: 2, kind: input, shape index: {}]
  %s3 = inlined_call_operand.hbm [shape: f32[128,128], index: 3, kind: input, shape index: {}]
  %s4 = inlined_call_operand.hbm [shape: f32[128,128], index: 4, kind: input, shape index: {}]
  %s5 = inlined_call_operand.hbm [shape: f32[8,128], index: 5, kind: output, shape index: {}]
  %s6 = sld [smem:[#allocation0]]
  $region46: #{tpu_custom_call.1} parent=0
    _
  %s8 = ssub.s32 1, %s6
  %s9 = scalar_select 0, %s8, %s6
  $region1: #{tpu_custom_call.1} parent=0
    #allocation3 [shape = 'u8[65536]{0}', space=vmem, size = 0x10000, scoped, tag = 'input window, operand 3, single buffered']
    #allocation4 [shape = 's32[1]{0}', space=sflag, size = 0x4, scoped, tag = 'scoped memory for tpu_custom_call.1']
    #allocation5 [shape = 's32[1]{0}', space=sflag, size = 0x4, scoped, tag = 'scoped memory for tpu_custom_call.1']
    #allocation6 [shape = 'u8[65536]{0}', space=vmem, size = 0x10000, scoped, tag = 'input window, operand 4, single buffered']
    #allocation7 [shape = 's32[1]{0}', space=sflag, size = 0x4, scoped, tag = 'scoped memory for tpu_custom_call.1']
    #allocation8 [shape = 'u8[4096]{0}', space=vmem, size = 0x1000, scoped, tag = 'output window, operand 0, single buffered']
    %10 = vsyncpa [#allocation4], 0
    %11 = vsyncpa [#allocation7], 0
    %12 = vsyncpa [#allocation5], 0
    // Predicated region
    $region2: #{tpu_custom_call.1} parent=1 // pred_check
      _
    $region3: #{tpu_custom_call.1} parent=1 // pred_check_branch
      %14 = sbr.rel (0) target = $region5
    $region4: #{tpu_custom_call.1} parent=1 // pred_region
      %s15 = sadd.s32 0, 0
      %s16 = smul.u32 2, %s15
      %p17 = scmp.lt.s32.totalorder %s16, 1
      %s18 = scalar_select %p17, %s16, 1
      %s19 = smul.addr %s18, 8
      %s20 = scalar_lea.vmem %s0, %s19
      %s21 = sadd.s32 0, 0
      %s22 = smul.u32 2, %s21
    $region5: #{tpu_custom_call.1} parent=1 // pred_fallthru
      _
    // Predicated region
    $region6: #{tpu_custom_call.1} parent=1 // pred_check
      _
    $region7: #{tpu_custom_call.1} parent=1 // pred_check_branch
      %24 = sbr.rel (0) target = $region9
    $region8: #{tpu_custom_call.1} parent=1 // pred_region
      %s25 = sadd.s32 0, 0
      %s26 = smul.u32 2, %s25
      %p27 = scmp.lt.s32.totalorder %s26, 1
      %s28 = scalar_select %p27, %s26, 1
      %s29 = smul.addr %s28, 8
      %s30 = scalar_lea.vmem %s1, %s29
      %s31 = sadd.s32 0, 0
      %s32 = smul.u32 2, %s31
    $region9: #{tpu_custom_call.1} parent=1 // pred_fallthru
      _
    // Predicated region
    $region10: #{tpu_custom_call.1} parent=1 // pred_check
      _
    $region11: #{tpu_custom_call.1} parent=1 // pred_check_branch
      %34 = sbr.rel (0) target = $region13
    $region12: #{tpu_custom_call.1} parent=1 // pred_region
      %s35 = sadd.s32 0, 0
      %s36 = smul.u32 2, %s35
      %p37 = scmp.lt.s32.totalorder %s36, 1
      %s38 = scalar_select %p37, %s36, 1
      %s39 = smul.addr %s38, 8
      %s40 = scalar_lea.vmem %s2, %s39
      %s41 = sadd.s32 0, 0
      %s42 = smul.u32 2, %s41
    $region13: #{tpu_custom_call.1} parent=1 // pred_fallthru
      _
    // Predicated region
    $region14: #{tpu_custom_call.1} parent=1 // pred_check
      _
    $region15: #{tpu_custom_call.1} parent=1 // pred_check_branch
      %44 = sbr.rel (0) target = $region17
    $region16: #{tpu_custom_call.1} parent=1 // pred_region
      %s46 = ssub.s32 2048, 2048
      %47 = vsyncadd [#allocation4], %s46
      %s48 = sshll.u32 [#allocation3], 4
      %s49 = int_to_ptr.vmem [resolvable:$true] %s48
      %54 = dma.hbm_to_vmem [thread:$0]  %s3, 2048, %s49, [#allocation4], 128, 128, 8
    $region17: #{tpu_custom_call.1} parent=1 // pred_fallthru
      _
    // Predicated region
    $region18: #{tpu_custom_call.1} parent=1 // pred_check
      _
    $region19: #{tpu_custom_call.1} parent=1 // pred_check_branch
      %56 = sbr.rel (0) target = $region21
    $region20: #{tpu_custom_call.1} parent=1 // pred_region
      %s58 = ssub.s32 2048, 2048
      %59 = vsyncadd [#allocation7], %s58
      %s60 = sshll.u32 [#allocation6], 4
      %s61 = int_to_ptr.vmem [resolvable:$true] %s60
      %66 = dma.hbm_to_vmem [thread:$0]  %s4, 2048, %s61, [#allocation7], 128, 128, 8
    $region21: #{tpu_custom_call.1} parent=1 // pred_fallthru
      _
    // Predicated region
    $region22: #{tpu_custom_call.1} parent=1 // pred_check
      _
    $region23: #{tpu_custom_call.1} parent=1 // pred_check_branch
      %68 = sbr.rel (0) target = $region25
    $region24: #{tpu_custom_call.1} parent=1 // pred_region
      %69 = dma.done [#allocation4], 2048
    $region25: #{tpu_custom_call.1} parent=1 // pred_fallthru
      _
    // Predicated region
    $region26: #{tpu_custom_call.1} parent=1 // pred_check
      _
    $region27: #{tpu_custom_call.1} parent=1 // pred_check_branch
      %71 = sbr.rel (0) target = $region29
    $region28: #{tpu_custom_call.1} parent=1 // pred_region
      %72 = dma.done [#allocation7], 2048
    $region29: #{tpu_custom_call.1} parent=1 // pred_fallthru
      _
    %s73 = sadd.s32 0, 0
    %s74 = smul.u32 2, %s73
    %p75 = scmp.lt.s32.totalorder %s74, 1
    %s76 = scalar_select %p75, %s74, 1
    %s77 = smul.addr %s76, 8
    %s78 = scalar_lea.vmem %s0, %s77
    %s79 = sadd.s32 0, 0
    %s80 = smul.u32 2, %s79
    %p81 = scmp.lt.s32.totalorder %s80, 1
    %s82 = scalar_select %p81, %s80, 1
    %s83 = smul.addr %s82, 8
    %s84 = scalar_lea.vmem %s1, %s83
    %s85 = sadd.s32 0, 0
    %s86 = smul.u32 2, %s85
    %p87 = scmp.lt.s32.totalorder %s86, 1
    %s88 = scalar_select %p87, %s86, 1
    %s89 = smul.addr %s88, 8
    %s90 = scalar_lea.vmem %s2, %s89
    %s91 = sadd.s32 0, 0
    %s92 = smul.u32 2, %s91
    %p93 = scmp.lt.s32.totalorder %s92, 1
    %s94 = scalar_select %p93, %s92, 1
    %s95 = smul.addr %s94, 8
    %s96 = scalar_lea.vmem %s0, %s95
    %s97 = sadd.s32 0, 0
    %s98 = smul.u32 2, %s97
    %s99 = sadd.s32 0, 0
    %s100 = smul.u32 2, %s99
    %p101 = scmp.lt.s32.totalorder %s100, 1
    %s102 = scalar_select %p101, %s100, 1
    %s103 = smul.addr %s102, 8
    %s104 = scalar_lea.vmem %s1, %s103
    %s105 = sadd.s32 0, 0
    %s106 = smul.u32 2, %s105
    %s107 = sadd.s32 0, 0
    %s108 = smul.u32 2, %s107
    %p109 = scmp.lt.s32.totalorder %s108, 1
    %s110 = scalar_select %p109, %s108, 1
    %s111 = smul.addr %s110, 8
    %s112 = scalar_lea.vmem %s2, %s111
    %s113 = sadd.s32 0, 0
    %s114 = smul.u32 2, %s113
    %p115 = scmp.eq.s32.totalorder 0, 0
    // Predicated region
    $region30: #{tpu_custom_call.1} parent=1 // pred_check
      %p116 = pneg %p115
    $region31: #{tpu_custom_call.1} parent=1 // pred_check_branch
      %118 = sbr.rel (%p116) target = $region33
    $region32: #{tpu_custom_call.1} parent=1 // pred_region
      %vm119 = vcmask 7168
      %120 = vst.msk [vmem:[#allocation2] sm:$0xff] %vm119, 0.0
      %121 = vst.msk [vmem:[#allocation2 + $0x8] sm:$0xff] %vm119, 0.0
    $region33: #{tpu_custom_call.1} parent=1 // pred_fallthru
      _
    %s122 = sadd.s32 0, 0
    %s123 = smul.u32 %s122, 16
    %v124 = vlaneseq
    %v125 = vand.u32 %v124, 127
    %v126 = vld [vmem:[%s96] sm:$0xff]
    %v127 = vld [vmem:[%s96 + $0x8] sm:$0xff]
    %v128 = vld [vmem:[%s104] sm:$0xff]
    %v129 = vld [vmem:[%s104 + $0x8] sm:$0xff]
    %v130 = vld [vmem:[%s112] sm:$0xff]
    %v131 = vld [vmem:[%s112 + $0x8] sm:$0xff]
    %132 = vset.pattern.permute.xlu0 0
    %133 = vperm.xlu0 %132, %v126
    %v134 = vpop.permute.xlu0 %133
    %135 = vset.pattern.permute.xlu0 0
    %136 = vperm.xlu0 %135, %v127
    %v137 = vpop.permute.xlu0 %136
    %vm138 = vcmp.eq.s32.totalorder %v125, %v134
    %vm139 = vcmp.eq.s32.totalorder %v125, %v137
    %v140 = vsel %vm138, 1, 0
    %v141 = vsel %vm139, 1, 0
    %v142 = vcvt.s32.f32 %v140
    %v143 = vcvt.s32.f32 %v141
    %v144 = vld [vmem:[#allocation3] sm:$0xff]
    %v145 = vld [vmem:[#allocation3 + $0x8] sm:$0xff]
    %v146 = vld [vmem:[#allocation3 + $0x10] sm:$0xff]
    %v147 = vld [vmem:[#allocation3 + $0x18] sm:$0xff]
    %v148 = vld [vmem:[#allocation3 + $0x20] sm:$0xff]
    %v149 = vld [vmem:[#allocation3 + $0x28] sm:$0xff]
    %v150 = vld [vmem:[#allocation3 + $0x30] sm:$0xff]
    %v151 = vld [vmem:[#allocation3 + $0x38] sm:$0xff]
    %v152 = vld [vmem:[#allocation3 + $0x40] sm:$0xff]
    %v153 = vld [vmem:[#allocation3 + $0x48] sm:$0xff]
    %v154 = vld [vmem:[#allocation3 + $0x50] sm:$0xff]
    %v155 = vld [vmem:[#allocation3 + $0x58] sm:$0xff]
    %v156 = vld [vmem:[#allocation3 + $0x60] sm:$0xff]
    %v157 = vld [vmem:[#allocation3 + $0x68] sm:$0xff]
    %v158 = vld [vmem:[#allocation3 + $0x70] sm:$0xff]
    %v159 = vld [vmem:[#allocation3 + $0x78] sm:$0xff]
    %160 = vmatprep.subr.mxu0 0.0
    %161 = vmatpush1.msra.mxu0 %v144
    %162 = vmatprep.subr.mxu0 0.0
    %163 = vmatpush1.msra.mxu0 %v145
    %164 = vmatprep.subr.mxu0 0.0
    %165 = vmatpush1.msra.mxu0 %v146
    %166 = vmatprep.subr.mxu0 0.0
    %167 = vmatpush1.msra.mxu0 %v147
    %168 = vmatprep.subr.mxu0 0.0
    %169 = vmatpush1.msra.mxu0 %v148
    %170 = vmatprep.subr.mxu0 0.0
    %171 = vmatpush1.msra.mxu0 %v149
    %172 = vmatprep.subr.mxu0 0.0
    %173 = vmatpush1.msra.mxu0 %v150
    %174 = vmatprep.subr.mxu0 0.0
    %175 = vmatpush1.msra.mxu0 %v151
    %176 = vmatprep.subr.mxu0 0.0
    %177 = vmatpush1.msra.mxu0 %v152
    %178 = vmatprep.subr.mxu0 0.0
    %179 = vmatpush1.msra.mxu0 %v153
    %180 = vmatprep.subr.mxu0 0.0
    %181 = vmatpush1.msra.mxu0 %v154
    %182 = vmatprep.subr.mxu0 0.0
    %183 = vmatpush1.msra.mxu0 %v155
    %184 = vmatprep.subr.mxu0 0.0
    %185 = vmatpush1.msra.mxu0 %v156
    %186 = vmatprep.subr.mxu0 0.0
    %187 = vmatpush1.msra.mxu0 %v157
    %188 = vmatprep.subr.mxu0 0.0
    %189 = vmatpush1.msra.mxu0 %v158
    %190 = vmatprep.subr.mxu0 0.0
    %191 = vmatpush1.msra.mxu0 %v159
    %192 = vmatprep.subr.mxu0 0.0
    %193 = vmatpush1.msra.mxu0 0.0
    %194 = vmatprep.subr.mxu0 0.0
    %195 = vmatpush1.msra.mxu0 0.0
    %196 = vmatprep.subr.mxu0 0.0
    %197 = vmatpush1.msra.mxu0 0.0
    %198 = vmatprep.subr.mxu0 0.0
    %199 = vmatpush1.msra.mxu0 0.0
    %200 = vmatprep.subr.mxu0 0.0
    %201 = vmatpush1.msra.mxu0 0.0
    %202 = vmatprep.subr.mxu0 0.0
    %203 = vmatpush1.msra.mxu0 0.0
    %204 = vmatprep.subr.mxu0 0.0
    %205 = vmatpush1.msra.mxu0 0.0
    %206 = vmatprep.subr.mxu0 0.0
    %207 = vmatpush1.msra.mxu0 0.0
    %208 = vmatprep.subr.mxu0 0.0
    %209 = vmatpush1.msra.mxu0 0.0
    %210 = vmatprep.subr.mxu0 0.0
    %211 = vmatpush1.msra.mxu0 0.0
    %212 = vmatprep.subr.mxu0 0.0
    %213 = vmatpush1.msra.mxu0 0.0
    %214 = vmatprep.subr.mxu0 0.0
    %215 = vmatpush1.msra.mxu0 0.0
    %216 = vmatprep.subr.mxu0 0.0
    %217 = vmatpush1.msra.mxu0 0.0
    %218 = vmatprep.subr.mxu0 0.0
    %219 = vmatpush1.msra.mxu0 0.0
    %220 = vmatprep.subr.mxu0 0.0
    %221 = vmatpush1.msra.mxu0 0.0
    %222 = vmatprep.subr.mxu0 0.0
    %223 = vmatpush1.msra.mxu0 0.0
    %224 = vmatprep.mubr.f32.mxu0 0.0
    %225 = vmatmul.mubr.f32.gmra.mrb[0].mxu0 %v142
    %v226 = vpop.f32.mrb[0].mxu0
    %v227 = vadd.f32 0.0, %v226
    %v228 = vpop.f32.mrb[0].mxu0
    %229 = vmatprep.mubr.f32.mxu0 0.0
    %230 = vmatmul.mubr.f32.gmra.mrb[0].mxu0 %v143
    %v231 = vpop.f32.mrb[0].mxu0
    %v232 = vadd.f32 0.0, %v231
    %v233 = vpop.f32.mrb[0].mxu0
    %234 = vdwg.mxu0
    %v235 = vld [vmem:[#allocation6] sm:$0xff]
    %v236 = vld [vmem:[#allocation6 + $0x8] sm:$0xff]
    %v237 = vld [vmem:[#allocation6 + $0x10] sm:$0xff]
    %v238 = vld [vmem:[#allocation6 + $0x18] sm:$0xff]
    %v239 = vld [vmem:[#allocation6 + $0x20] sm:$0xff]
    %v240 = vld [vmem:[#allocation6 + $0x28] sm:$0xff]
    %v241 = vld [vmem:[#allocation6 + $0x30] sm:$0xff]
    %v242 = vld [vmem:[#allocation6 + $0x38] sm:$0xff]
    %v243 = vld [vmem:[#allocation6 + $0x40] sm:$0xff]
    %v244 = vld [vmem:[#allocation6 + $0x48] sm:$0xff]
    %v245 = vld [vmem:[#allocation6 + $0x50] sm:$0xff]
    %v246 = vld [vmem:[#allocation6 + $0x58] sm:$0xff]
    %v247 = vld [vmem:[#allocation6 + $0x60] sm:$0xff]
    %v248 = vld [vmem:[#allocation6 + $0x68] sm:$0xff]
    %v249 = vld [vmem:[#allocation6 + $0x70] sm:$0xff]
    %v250 = vld [vmem:[#allocation6 + $0x78] sm:$0xff]
    %251 = vmatprep.subr.mxu0 0.0
    %252 = vmatpush1.msra.mxu0 %v235
    %253 = vmatprep.subr.mxu0 0.0
    %254 = vmatpush1.msra.mxu0 %v236
    %255 = vmatprep.subr.mxu0 0.0
    %256 = vmatpush1.msra.mxu0 %v237
    %257 = vmatprep.subr.mxu0 0.0
    %258 = vmatpush1.msra.mxu0 %v238
    %259 = vmatprep.subr.mxu0 0.0
    %260 = vmatpush1.msra.mxu0 %v239
    %261 = vmatprep.subr.mxu0 0.0
    %262 = vmatpush1.msra.mxu0 %v240
    %263 = vmatprep.subr.mxu0 0.0
    %264 = vmatpush1.msra.mxu0 %v241
    %265 = vmatprep.subr.mxu0 0.0
    %266 = vmatpush1.msra.mxu0 %v242
    %267 = vmatprep.subr.mxu0 0.0
    %268 = vmatpush1.msra.mxu0 %v243
    %269 = vmatprep.subr.mxu0 0.0
    %270 = vmatpush1.msra.mxu0 %v244
    %271 = vmatprep.subr.mxu0 0.0
    %272 = vmatpush1.msra.mxu0 %v245
    %273 = vmatprep.subr.mxu0 0.0
    %274 = vmatpush1.msra.mxu0 %v246
    %275 = vmatprep.subr.mxu0 0.0
    %276 = vmatpush1.msra.mxu0 %v247
    %277 = vmatprep.subr.mxu0 0.0
    %278 = vmatpush1.msra.mxu0 %v248
    %279 = vmatprep.subr.mxu0 0.0
    %280 = vmatpush1.msra.mxu0 %v249
    %281 = vmatprep.subr.mxu0 0.0
    %282 = vmatpush1.msra.mxu0 %v250
    %283 = vmatprep.subr.mxu0 0.0
    %284 = vmatpush1.msra.mxu0 0.0
    %285 = vmatprep.subr.mxu0 0.0
    %286 = vmatpush1.msra.mxu0 0.0
    %287 = vmatprep.subr.mxu0 0.0
    %288 = vmatpush1.msra.mxu0 0.0
    %289 = vmatprep.subr.mxu0 0.0
    %290 = vmatpush1.msra.mxu0 0.0
    %291 = vmatprep.subr.mxu0 0.0
    %292 = vmatpush1.msra.mxu0 0.0
    %293 = vmatprep.subr.mxu0 0.0
    %294 = vmatpush1.msra.mxu0 0.0
    %295 = vmatprep.subr.mxu0 0.0
    %296 = vmatpush1.msra.mxu0 0.0
    %297 = vmatprep.subr.mxu0 0.0
    %298 = vmatpush1.msra.mxu0 0.0
    %299 = vmatprep.subr.mxu0 0.0
    %300 = vmatpush1.msra.mxu0 0.0
    %301 = vmatprep.subr.mxu0 0.0
    %302 = vmatpush1.msra.mxu0 0.0
    %303 = vmatprep.subr.mxu0 0.0
    %304 = vmatpush1.msra.mxu0 0.0
    %305 = vmatprep.subr.mxu0 0.0
    %306 = vmatpush1.msra.mxu0 0.0
    %307 = vmatprep.subr.mxu0 0.0
    %308 = vmatpush1.msra.mxu0 0.0
    %309 = vmatprep.subr.mxu0 0.0
    %310 = vmatpush1.msra.mxu0 0.0
    %311 = vmatprep.subr.mxu0 0.0
    %312 = vmatpush1.msra.mxu0 0.0
    %313 = vmatprep.subr.mxu0 0.0
    %314 = vmatpush1.msra.mxu0 0.0
    %315 = vmatprep.mubr.f32.mxu0 0.0
    %316 = vmatmul.mubr.f32.gmra.mrb[0].mxu0 %v227
    %v317 = vpop.f32.mrb[0].mxu0
    %v318 = vadd.f32 0.0, %v317
    %v319 = vpop.f32.mrb[0].mxu0
    %320 = vmatprep.mubr.f32.mxu0 0.0
    %321 = vmatmul.mubr.f32.gmra.mrb[0].mxu0 %v232
    %v322 = vpop.f32.mrb[0].mxu0
    %v323 = vadd.f32 0.0, %v322
    %v324 = vpop.f32.mrb[0].mxu0
    %325 = vdwg.mxu0
    %326 = vset.pattern.permute.xlu0 0
    %327 = vperm.xlu0 %326, %v128
    %v328 = vpop.permute.xlu0 %327
    %329 = vset.pattern.permute.xlu0 0
    %330 = vperm.xlu0 %329, %v129
    %v331 = vpop.permute.xlu0 %330
    %vm332 = vcmp.eq.s32.totalorder %v125, %v328
    %vm333 = vcmp.eq.s32.totalorder %v125, %v331
    %v334 = vsel %vm332, %v318, 0.0
    %v335 = vsel %vm333, %v323, 0.0
    %336 = vadd.xlane.f32.xlu0 %v334
    %v337 = vpop.xlane.xlu0 %336
    %338 = vadd.xlane.f32.xlu0 %v335
    %v339 = vpop.xlane.xlu0 %338
    %v340 = vmin.f32 %v337, 0.0
    %v341 = vmin.f32 %v339, 0.0
    %v342 = vand.u32 2147483647, %v337
    %v343 = vand.u32 2147483647, %v339
    %v344 = vsub.f32 0.0, %v342
    %v345 = vsub.f32 0.0, %v343
    %v346 = vmul.f32 %v344, 1.442695
    %v347 = vpow.pop %v346
    %v348 = vmul.f32 %v345, 1.442695
    %v349 = vpow.pop %v348
    %v350 = vadd.f32 %v347, 1.0
    %v351 = vadd.f32 %v349, 1.0
    %v352 = vlog2.pop %v350
    %v353 = vmul.f32 %v352, 0.6931472
    %v354 = vlog2.pop %v351
    %v355 = vmul.f32 %v354, 0.6931472
    %v356 = vsub.f32 %v340, %v353
    %v357 = vsub.f32 %v341, %v355
    %358 = vset.pattern.permute.xlu0 0
    %359 = vperm.xlu0 %358, %v130
    %v360 = vpop.permute.xlu0 %359
    %361 = vset.pattern.permute.xlu0 0
    %362 = vperm.xlu0 %361, %v131
    %v363 = vpop.permute.xlu0 %362
    %vm364 = vcmp.eq.s32.totalorder %v125, %v360
    %vm365 = vcmp.eq.s32.totalorder %v125, %v363
    %v366 = vsel %vm364, %v318, 0.0
    %v367 = vsel %vm365, %v323, 0.0
    %368 = vadd.xlane.f32.xlu0 %v366
    %v369 = vpop.xlane.xlu0 %368
    %370 = vadd.xlane.f32.xlu0 %v367
    %v371 = vpop.xlane.xlu0 %370
    %v372 = vsub.f32 0.0, %v369
    %v373 = vsub.f32 0.0, %v371
    %v374 = vmin.f32 %v372, 0.0
    %v375 = vmin.f32 %v373, 0.0
    %v376 = vand.u32 2147483647, %v372
    %v377 = vand.u32 2147483647, %v373
    %v378 = vsub.f32 0.0, %v376
    %v379 = vsub.f32 0.0, %v377
    %v380 = vmul.f32 %v378, 1.442695
    %v381 = vpow.pop %v380
    %v382 = vmul.f32 %v379, 1.442695
    %v383 = vpow.pop %v382
    %v384 = vadd.f32 %v381, 1.0
    %v385 = vadd.f32 %v383, 1.0
    %v386 = vlog2.pop %v384
    %v387 = vmul.f32 %v386, 0.6931472
    %v388 = vlog2.pop %v385
    %v389 = vmul.f32 %v388, 0.6931472
    %v390 = vsub.f32 %v374, %v387
    %v391 = vsub.f32 %v375, %v389
    %v392 = vadd.f32 %v356, %v390
    %v393 = vadd.f32 %v357, %v391
    %394 = vset.pattern.permute.xlu0 1
    %395 = vperm.xlu0 %394, %v130
    %v396 = vpop.permute.xlu0 %395
    %397 = vset.pattern.permute.xlu0 1
    %398 = vperm.xlu0 %397, %v131
    %v399 = vpop.permute.xlu0 %398
    %vm400 = vcmp.eq.s32.totalorder %v125, %v396
    %vm401 = vcmp.eq.s32.totalorder %v125, %v399
    %v402 = vsel %vm400, %v318, 0.0
    %v403 = vsel %vm401, %v323, 0.0
    %404 = vadd.xlane.f32.xlu0 %v402
    %v405 = vpop.xlane.xlu0 %404
    %406 = vadd.xlane.f32.xlu0 %v403
    %v407 = vpop.xlane.xlu0 %406
    %v408 = vsub.f32 0.0, %v405
    %v409 = vsub.f32 0.0, %v407
    %v410 = vmin.f32 %v408, 0.0
    %v411 = vmin.f32 %v409, 0.0
    %v412 = vand.u32 2147483647, %v408
    %v413 = vand.u32 2147483647, %v409
    %v414 = vsub.f32 0.0, %v412
    %v415 = vsub.f32 0.0, %v413
    %v416 = vmul.f32 %v414, 1.442695
    %v417 = vpow.pop %v416
    %v418 = vmul.f32 %v415, 1.442695
    %v419 = vpow.pop %v418
    %v420 = vadd.f32 %v417, 1.0
    %v421 = vadd.f32 %v419, 1.0
    %v422 = vlog2.pop %v420
    %v423 = vmul.f32 %v422, 0.6931472
    %v424 = vlog2.pop %v421
    %v425 = vmul.f32 %v424, 0.6931472
    %v426 = vsub.f32 %v410, %v423
    %v427 = vsub.f32 %v411, %v425
    %v428 = vadd.f32 %v392, %v426
    %v429 = vadd.f32 %v393, %v427
    %430 = vset.pattern.permute.xlu0 2
    %431 = vperm.xlu0 %430, %v130
    %v432 = vpop.permute.xlu0 %431
    %433 = vset.pattern.permute.xlu0 2
    %434 = vperm.xlu0 %433, %v131
    %v435 = vpop.permute.xlu0 %434
    %vm436 = vcmp.eq.s32.totalorder %v125, %v432
    %vm437 = vcmp.eq.s32.totalorder %v125, %v435
    %v438 = vsel %vm436, %v318, 0.0
    %v439 = vsel %vm437, %v323, 0.0
    %440 = vadd.xlane.f32.xlu0 %v438
    %v441 = vpop.xlane.xlu0 %440
    %442 = vadd.xlane.f32.xlu0 %v439
    %v443 = vpop.xlane.xlu0 %442
    %v444 = vsub.f32 0.0, %v441
    %v445 = vsub.f32 0.0, %v443
    %v446 = vmin.f32 %v444, 0.0
    %v447 = vmin.f32 %v445, 0.0
    %v448 = vand.u32 2147483647, %v444
    %v449 = vand.u32 2147483647, %v445
    %v450 = vsub.f32 0.0, %v448
    %v451 = vsub.f32 0.0, %v449
    %v452 = vmul.f32 %v450, 1.442695
    %v453 = vpow.pop %v452
    %v454 = vmul.f32 %v451, 1.442695
    %v455 = vpow.pop %v454
    %v456 = vadd.f32 %v453, 1.0
    %v457 = vadd.f32 %v455, 1.0
    %v458 = vlog2.pop %v456
    %v459 = vmul.f32 %v458, 0.6931472
    %v460 = vlog2.pop %v457
    %v461 = vmul.f32 %v460, 0.6931472
    %v462 = vsub.f32 %v446, %v459
    %v463 = vsub.f32 %v447, %v461
    %v464 = vadd.f32 %v428, %v462
    %v465 = vadd.f32 %v429, %v463
    %466 = vset.pattern.permute.xlu0 3
    %467 = vperm.xlu0 %466, %v130
    %v468 = vpop.permute.xlu0 %467
    %469 = vset.pattern.permute.xlu0 3
    %470 = vperm.xlu0 %469, %v131
    %v471 = vpop.permute.xlu0 %470
    %vm472 = vcmp.eq.s32.totalorder %v125, %v468
    %vm473 = vcmp.eq.s32.totalorder %v125, %v471
    %v474 = vsel %vm472, %v318, 0.0
    %v475 = vsel %vm473, %v323, 0.0
    %476 = vadd.xlane.f32.xlu0 %v474
    %v477 = vpop.xlane.xlu0 %476
    %478 = vadd.xlane.f32.xlu0 %v475
    %v479 = vpop.xlane.xlu0 %478
    %v480 = vsub.f32 0.0, %v477
    %v481 = vsub.f32 0.0, %v479
    %v482 = vmin.f32 %v480, 0.0
    %v483 = vmin.f32 %v481, 0.0
    %v484 = vand.u32 2147483647, %v480
    %v485 = vand.u32 2147483647, %v481
    %v486 = vsub.f32 0.0, %v484
    %v487 = vsub.f32 0.0, %v485
    %v488 = vmul.f32 %v486, 1.442695
    %v489 = vpow.pop %v488
    %v490 = vmul.f32 %v487, 1.442695
    %v491 = vpow.pop %v490
    %v492 = vadd.f32 %v489, 1.0
    %v493 = vadd.f32 %v491, 1.0
    %v494 = vlog2.pop %v492
    %v495 = vmul.f32 %v494, 0.6931472
    %v496 = vlog2.pop %v493
    %v497 = vmul.f32 %v496, 0.6931472
    %v498 = vsub.f32 %v482, %v495
    %v499 = vsub.f32 %v483, %v497
    %v500 = vadd.f32 %v464, %v498
    %v501 = vadd.f32 %v465, %v499
    %502 = vset.pattern.permute.xlu0 4
    %503 = vperm.xlu0 %502, %v130
    %v504 = vpop.permute.xlu0 %503
    %505 = vset.pattern.permute.xlu0 4
    %506 = vperm.xlu0 %505, %v131
    %v507 = vpop.permute.xlu0 %506
    %vm508 = vcmp.eq.s32.totalorder %v125, %v504
    %vm509 = vcmp.eq.s32.totalorder %v125, %v507
    %v510 = vsel %vm508, %v318, 0.0
    %v511 = vsel %vm509, %v323, 0.0
    %512 = vadd.xlane.f32.xlu0 %v510
    %v513 = vpop.xlane.xlu0 %512
    %514 = vadd.xlane.f32.xlu0 %v511
    %v515 = vpop.xlane.xlu0 %514
    %v516 = vsub.f32 0.0, %v513
    %v517 = vsub.f32 0.0, %v515
    %v518 = vmin.f32 %v516, 0.0
    %v519 = vmin.f32 %v517, 0.0
    %v520 = vand.u32 2147483647, %v516
    %v521 = vand.u32 2147483647, %v517
    %v522 = vsub.f32 0.0, %v520
    %v523 = vsub.f32 0.0, %v521
    %v524 = vmul.f32 %v522, 1.442695
    %v525 = vpow.pop %v524
    %v526 = vmul.f32 %v523, 1.442695
    %v527 = vpow.pop %v526
    %v528 = vadd.f32 %v525, 1.0
    %v529 = vadd.f32 %v527, 1.0
    %v530 = vlog2.pop %v528
    %v531 = vmul.f32 %v530, 0.6931472
    %v532 = vlog2.pop %v529
    %v533 = vmul.f32 %v532, 0.6931472
    %v534 = vsub.f32 %v518, %v531
    %v535 = vsub.f32 %v519, %v533
    %v536 = vadd.f32 %v500, %v534
    %v537 = vadd.f32 %v501, %v535
    %538 = vset.pattern.permute.xlu0 5
    %539 = vperm.xlu0 %538, %v130
    %v540 = vpop.permute.xlu0 %539
    %541 = vset.pattern.permute.xlu0 5
    %542 = vperm.xlu0 %541, %v131
    %v543 = vpop.permute.xlu0 %542
    %vm544 = vcmp.eq.s32.totalorder %v125, %v540
    %vm545 = vcmp.eq.s32.totalorder %v125, %v543
    %v546 = vsel %vm544, %v318, 0.0
    %v547 = vsel %vm545, %v323, 0.0
    %548 = vadd.xlane.f32.xlu0 %v546
    %v549 = vpop.xlane.xlu0 %548
    %550 = vadd.xlane.f32.xlu0 %v547
    %v551 = vpop.xlane.xlu0 %550
    %v552 = vsub.f32 0.0, %v549
    %v553 = vsub.f32 0.0, %v551
    %v554 = vmin.f32 %v552, 0.0
    %v555 = vmin.f32 %v553, 0.0
    %v556 = vand.u32 2147483647, %v552
    %v557 = vand.u32 2147483647, %v553
    %v558 = vsub.f32 0.0, %v556
    %v559 = vsub.f32 0.0, %v557
    %v560 = vmul.f32 %v558, 1.442695
    %v561 = vpow.pop %v560
    %v562 = vmul.f32 %v559, 1.442695
    %v563 = vpow.pop %v562
    %v564 = vadd.f32 %v561, 1.0
    %v565 = vadd.f32 %v563, 1.0
    %v566 = vlog2.pop %v564
    %v567 = vmul.f32 %v566, 0.6931472
    %v568 = vlog2.pop %v565
    %v569 = vmul.f32 %v568, 0.6931472
    %v570 = vsub.f32 %v554, %v567
    %v571 = vsub.f32 %v555, %v569
    %v572 = vadd.f32 %v536, %v570
    %v573 = vadd.f32 %v537, %v571
    %574 = vset.pattern.permute.xlu0 6
    %575 = vperm.xlu0 %574, %v130
    %v576 = vpop.permute.xlu0 %575
    %577 = vset.pattern.permute.xlu0 6
    %578 = vperm.xlu0 %577, %v131
    %v579 = vpop.permute.xlu0 %578
    %vm580 = vcmp.eq.s32.totalorder %v125, %v576
    %vm581 = vcmp.eq.s32.totalorder %v125, %v579
    %v582 = vsel %vm580, %v318, 0.0
    %v583 = vsel %vm581, %v323, 0.0
    %584 = vadd.xlane.f32.xlu0 %v582
    %v585 = vpop.xlane.xlu0 %584
    %586 = vadd.xlane.f32.xlu0 %v583
    %v587 = vpop.xlane.xlu0 %586
    %v588 = vsub.f32 0.0, %v585
    %v589 = vsub.f32 0.0, %v587
    %v590 = vmin.f32 %v588, 0.0
    %v591 = vmin.f32 %v589, 0.0
    %v592 = vand.u32 2147483647, %v588
    %v593 = vand.u32 2147483647, %v589
    %v594 = vsub.f32 0.0, %v592
    %v595 = vsub.f32 0.0, %v593
    %v596 = vmul.f32 %v594, 1.442695
    %v597 = vpow.pop %v596
    %v598 = vmul.f32 %v595, 1.442695
    %v599 = vpow.pop %v598
    %v600 = vadd.f32 %v597, 1.0
    %v601 = vadd.f32 %v599, 1.0
    %v602 = vlog2.pop %v600
    %v603 = vmul.f32 %v602, 0.6931472
    %v604 = vlog2.pop %v601
    %v605 = vmul.f32 %v604, 0.6931472
    %v606 = vsub.f32 %v590, %v603
    %v607 = vsub.f32 %v591, %v605
    %v608 = vadd.f32 %v572, %v606
    %v609 = vadd.f32 %v573, %v607
    %610 = vset.pattern.permute.xlu0 7
    %611 = vperm.xlu0 %610, %v130
    %v612 = vpop.permute.xlu0 %611
    %613 = vset.pattern.permute.xlu0 7
    %614 = vperm.xlu0 %613, %v131
    %v615 = vpop.permute.xlu0 %614
    %vm616 = vcmp.eq.s32.totalorder %v125, %v612
    %vm617 = vcmp.eq.s32.totalorder %v125, %v615
    %v618 = vsel %vm616, %v318, 0.0
    %v619 = vsel %vm617, %v323, 0.0
    %620 = vadd.xlane.f32.xlu0 %v618
    %v621 = vpop.xlane.xlu0 %620
    %622 = vadd.xlane.f32.xlu0 %v619
    %v623 = vpop.xlane.xlu0 %622
    %v624 = vsub.f32 0.0, %v621
    %v625 = vsub.f32 0.0, %v623
    %v626 = vmin.f32 %v624, 0.0
    %v627 = vmin.f32 %v625, 0.0
    %v628 = vand.u32 2147483647, %v624
    %v629 = vand.u32 2147483647, %v625
    %v630 = vsub.f32 0.0, %v628
    %v631 = vsub.f32 0.0, %v629
    %v632 = vmul.f32 %v630, 1.442695
    %v633 = vpow.pop %v632
    %v634 = vmul.f32 %v631, 1.442695
    %v635 = vpow.pop %v634
    %v636 = vadd.f32 %v633, 1.0
    %v637 = vadd.f32 %v635, 1.0
    %v638 = vlog2.pop %v636
    %v639 = vmul.f32 %v638, 0.6931472
    %v640 = vlog2.pop %v637
    %v641 = vmul.f32 %v640, 0.6931472
    %v642 = vsub.f32 %v626, %v639
    %v643 = vsub.f32 %v627, %v641
    %v644 = vadd.f32 %v608, %v642
    %v645 = vadd.f32 %v609, %v643
    %v646 = vlaneseq
    %v647 = vshrl.u32 %v646, 7
    %v648 = vadd.s32 %v647, 8
    %v649 = vstv %s123
    %v650 = vadd.s32 %v647, %v649
    %v651 = vadd.s32 %v648, %v649
    %v652 = vld [vmem:[#allocation2] sm:$0xff]
    %v653 = vld [vmem:[#allocation2 + $0x8] sm:$0xff]
    %vm654 = vcmp.lt.s32.totalorder %v650, 8
    %vm655 = vcmp.lt.s32.totalorder %v651, 8
    %v656 = vsel %vm654, %v644, 0.0
    %v657 = vsel %vm655, %v645, 0.0
    %v658 = vadd.f32 %v652, %v656
    %v659 = vadd.f32 %v653, %v657
    %vm660 = vcmask 7168
    %661 = vst.msk [vmem:[#allocation2] sm:$0xff] %vm660, %v658
    %662 = vst.msk [vmem:[#allocation2 + $0x8] sm:$0xff] %vm660, %v659
    // Predicated region
    $region34: #{tpu_custom_call.1} parent=1 // pred_check
      %p663 = pneg %p115
    $region35: #{tpu_custom_call.1} parent=1 // pred_check_branch
      %665 = sbr.rel (%p663) target = $region37
    $region36: #{tpu_custom_call.1} parent=1 // pred_region
      %v666 = vld [vmem:[#allocation2] sm:$0xff]
      %v667 = vld [vmem:[#allocation2 + $0x8] sm:$0xff]
      %v668 = vsel %vm660, %v666, 0.0
      %v669 = vsel %vm660, %v667, 0.0
      %v670 = vadd.f32 %v668, %v669
      %671 = vadd.xlane.f32.xlu0 %v670
      %v672 = vpop.xlane.xlu0 %671
      %v673 = vrot.slane %v672, 4
      %v674 = vadd.f32 %v672, %v673
      %v675 = vrot.slane %v674, 2
      %v676 = vadd.f32 %v674, %v675
      %v677 = vrot.slane %v676, 1
      %v678 = vadd.f32 %v676, %v677
      %s679 = vtos %v678
      %v680 = vstv %s679
      %v681 = vsub.f32 0.0, %v680
      %v682 = vrcp.pop 8.0
      %v683 = vmul.f32 %v681, %v682
      %684 = vst [vmem:[#allocation8] sm:$0xff] %v683
    $region37: #{tpu_custom_call.1} parent=1 // pred_fallthru
      _
    // Predicated region
    $region38: #{tpu_custom_call.1} parent=1 // pred_check
      _
    $region39: #{tpu_custom_call.1} parent=1 // pred_check_branch
      %686 = sbr.rel (0) target = $region41
    $region40: #{tpu_custom_call.1} parent=1 // pred_region
      %s688 = ssub.s32 128, 128
      %689 = vsyncadd [#allocation5], %s688
      %s691 = sshll.u32 [#allocation8], 4
      %s692 = int_to_ptr.vmem [resolvable:$true] %s691
      %694 = dma.vmem_to_hbm [thread:$0]  %s692, 128, %s5, [#allocation5]
    $region41: #{tpu_custom_call.1} parent=1 // pred_fallthru
      _
    // Predicated region
    $region42: #{tpu_custom_call.1} parent=1 // pred_check
      _
    $region43: #{tpu_custom_call.1} parent=1 // pred_check_branch
      %696 = sbr.rel (0) target = $region45
    $region44: #{tpu_custom_call.1} parent=1 // pred_region
      %697 = dma.done [#allocation5], 128
    $region45: #{tpu_custom_call.1} parent=1 // pred_fallthru
      _
    %698 = vsyncpa [#allocation4], 1
    %699 = vsyncpa [#allocation7], 1
    %700 = vsyncpa [#allocation5], 1

</llo_original>
